<compile_context>
chip_gen: v7x
topology: tpu7x:2x2x1
jax: 0.10.0
libtpu: 0.0.40
codegen_flags: <defaults>
</compile_context>

<pallas_src>
import jax
import jax.numpy as jnp
from jax import lax
from jax.experimental import pallas as pl
from jax.experimental.pallas import tpu as pltpu

# ---- problem sizes (small, consistent with an image -> 2-target predictor) ----
B, C, H, W = 2, 4, 16, 16          # input image batch (NCHW)
D_FLAT = C * H * W                 # 1024  flattened image
D_ENC = 32                         # config['network']['input_dim'] (encoder feature dim)
KAN_OUT = 32                       # KAN layer output dim
NUM_KERNELS = 4                    # KAN num_kernels (default 4)
FC_OUT = 32                        # FC layer units
N_OUT = 2                          # final Linear(prev_units, 2)

NOUT_PAD = 128                     # lane-padded output width (real output sliced outside)
KAN_FUSED = NUM_KERNELS * D_ENC    # 128 -> one lane-full contraction
MAX_TB = 256                       # batch-tile cap: full MXU M on v6e/v7x, 2x v5e's 128

# rows of the packed (8, 128) small-vector slab
ROW_KAN_C, ROW_KAN_IW, ROW_B_OUT, ROW_B_ENC, ROW_B_KAN, ROW_B_FC = 0, 1, 2, 3, 4, 5


def predictor_kernel(
    x_ref,          # (TB, D_FLAT)        f32  (cast to bf16 in-kernel)
    w_enc_ref,      # (D_FLAT, D_ENC)     bf16 (natural orientation, no RHS transpose)
    vec_ref,        # (8, 128)            f32  packed small vectors (one vreg)
    w_kan_ref,      # (KAN_FUSED, KAN_OUT) f32
    w_fc_ref,       # (KAN_OUT, FC_OUT)    f32
    w_out_ref,      # (FC_OUT, NOUT_PAD)   f32 (lane-padded head)
    out_ref,        # (TB, NOUT_PAD)       f32
):
    vec = vec_ref[...]                                   # (8, 128), one vreg load
    x = x_ref[...].astype(jnp.bfloat16)                  # in-kernel cast (VPU, hidden under MXU)

    # ---------------- encoder stand-in: Linear + ReLU -------------------------
    enc = jnp.dot(x, w_enc_ref[...], preferred_element_type=jnp.float32)   # (TB, D_ENC)
    enc = jnp.maximum(enc + vec[ROW_B_ENC:ROW_B_ENC + 1, :D_ENC], 0.0)

    # ---------------- F.normalize(enc, p=2, dim=1) via rsqrt ------------------
    ssq = jnp.sum(enc * enc, axis=1, keepdims=True)                         # (TB, 1)
    enc = enc * lax.rsqrt(jnp.maximum(ssq, 1e-24))       # == x / max(||x||, 1e-12)

    # ---------------- KANLayer: fused single 128-wide matmul -------------------
    # ker[b, k*D_ENC + i] = exp(-(enc[b,i] - c[k])^2 / (2*w[k]^2))
    enc_rep = jnp.tile(enc, (1, NUM_KERNELS))                               # (TB, KAN_FUSED)
    diff = enc_rep - vec[ROW_KAN_C:ROW_KAN_C + 1, :]
    ker = jnp.exp(-(diff * diff) * vec[ROW_KAN_IW:ROW_KAN_IW + 1, :])       # (TB, KAN_FUSED)
    kan = jnp.dot(ker, w_kan_ref[...], preferred_element_type=jnp.float32)
    kan = jnp.maximum(kan + vec[ROW_B_KAN:ROW_B_KAN + 1, :KAN_OUT], 0.0)    # act_kan: ReLU
    # dropout: eval/predict mode -> identity

    # ---------------- FC + ReLU -------------------------------------------------
    fc = jnp.dot(kan, w_fc_ref[...], preferred_element_type=jnp.float32)
    fc = jnp.maximum(fc + vec[ROW_B_FC:ROW_B_FC + 1, :FC_OUT], 0.0)         # (TB, FC_OUT)

    # ---------------- output Linear(prev_units, 2) (lane-padded, unmasked vst) --
    out = jnp.dot(fc, w_out_ref[...], preferred_element_type=jnp.float32)
    out_ref[...] = out + vec[ROW_B_OUT:ROW_B_OUT + 1, :]                    # (TB, NOUT_PAD)


@jax.jit
def predictor_forward(x_img, kp):
    b_in = x_img.shape[0]
    x_flat = x_img.reshape(b_in, D_FLAT)     # f32; bf16 cast happens inside the kernel

    # Batch tiling: small batches -> single tile equal to the full array
    # (no host-side pad); large batches -> 256-row tiles (pads only the tail).
    if b_in <= MAX_TB:
        tb, bp = b_in, b_in
    else:
        tb = MAX_TB
        bp = pl.cdiv(b_in, tb) * tb
        if bp != b_in:
            x_flat = jnp.pad(x_flat, ((0, bp - b_in), (0, 0)))
    num_tiles = bp // tb

    const = lambda i: (0, 0)   # weights: same block every grid step -> resident in VMEM

    grid_spec = pltpu.PrefetchScalarGridSpec(
        num_scalar_prefetch=0,
        grid=(num_tiles,),
        in_specs=[
            pl.BlockSpec((tb, D_FLAT), lambda i: (i, 0)),        # x tile (f32)
            pl.BlockSpec((D_FLAT, D_ENC), const),                # w_enc natural (bf16)
            pl.BlockSpec((8, 128), const),                       # packed small vectors
            pl.BlockSpec((KAN_FUSED, KAN_OUT), const),           # w_kan_flat
            pl.BlockSpec((KAN_OUT, FC_OUT), const),              # w_fc
            pl.BlockSpec((FC_OUT, NOUT_PAD), const),             # w_out (lane-padded)
        ],
        out_specs=pl.BlockSpec((tb, NOUT_PAD), lambda i: (i, 0)),
    )

    out_pad = pl.pallas_call(
        predictor_kernel,
        out_shape=jax.ShapeDtypeStruct((bp, NOUT_PAD), jnp.float32),
        grid_spec=grid_spec,
        compiler_params=pltpu.CompilerParams(
            dimension_semantics=("parallel",)),   # shards tiles across v7x's 2 TCs
    )(
        x_flat,
        kp["w_enc_nat"], kp["vec_pack"],
        kp["w_kan_flat"], kp["w_fc"], kp["w_out_pad"],
    )
    return out_pad[:b_in, :N_OUT]


def init_params(key):
    """Deterministic synthetic parameters matching the PyTorch module's shapes."""
    ks = jax.random.split(key, 8)

    def kaiming_uniform(k, fan_in, shape):
        bound = jnp.sqrt(6.0 / fan_in)  # kaiming_uniform_ (relu gain sqrt(2)) -> sqrt(6/fan_in)
        return jax.random.uniform(k, shape, jnp.float32, -bound, bound)

    # encoder stand-in Linear(D_FLAT, D_ENC)
    w_enc = kaiming_uniform(ks[0], D_FLAT, (D_FLAT, D_ENC))
    b_enc = jnp.zeros((D_ENC,), jnp.float32)

    # KANLayer(D_ENC, KAN_OUT, NUM_KERNELS): torch weights (out, in, K) -> (K, in, out)
    w_kan_torch = jax.random.normal(ks[1], (KAN_OUT, D_ENC, NUM_KERNELS), jnp.float32)
    w_kan = jnp.transpose(w_kan_torch, (2, 1, 0))                     # (K, D_ENC, KAN_OUT)
    b_kan = jnp.zeros((KAN_OUT,), jnp.float32)
    centers = jnp.linspace(-1.0, 1.0, NUM_KERNELS).astype(jnp.float32)  # (K,)
    widths = jnp.ones((NUM_KERNELS,), jnp.float32) * 0.1                # (K,)

    # FC Linear(KAN_OUT, FC_OUT)
    w_fc = kaiming_uniform(ks[2], KAN_OUT, (KAN_OUT, FC_OUT))
    b_fc = jnp.zeros((FC_OUT,), jnp.float32)

    # output Linear(FC_OUT, 2)
    w_out = kaiming_uniform(ks[3], FC_OUT, (FC_OUT, N_OUT))
    b_out = jnp.zeros((N_OUT,), jnp.float32)

    return dict(
        centers=centers, widths=widths,
        w_enc=w_enc, b_enc=b_enc,
        w_kan=w_kan, b_kan=b_kan,
        w_fc=w_fc, b_fc=b_fc,
        w_out=w_out, b_out=b_out,
    )


def prepare_kernel_params(p):
    """Reshape / transpose / cast / pack params once on host into kernel layouts."""
    # packed (8, 128) slab of all small vectors -> single BlockSpec input, one vreg
    vec = jnp.zeros((8, 128), jnp.float32)
    vec = vec.at[ROW_KAN_C, :].set(jnp.repeat(p["centers"], D_ENC))                 # c[k] at k*32+i
    vec = vec.at[ROW_KAN_IW, :].set(jnp.repeat(1.0 / (2.0 * p["widths"] ** 2), D_ENC))
    vec = vec.at[ROW_B_OUT, :N_OUT].set(p["b_out"])                                 # lane-padded head bias
    vec = vec.at[ROW_B_ENC, :D_ENC].set(p["b_enc"])
    vec = vec.at[ROW_B_KAN, :KAN_OUT].set(p["b_kan"])
    vec = vec.at[ROW_B_FC, :FC_OUT].set(p["b_fc"])

    return dict(
        # natural orientation (D_FLAT, D_ENC): no in-kernel RHS transpose; bf16 halves DMA bytes
        # NOTE: bf16 encoder weights are a perf choice; downstream L2-normalize bounds the error.
        w_enc_nat=p["w_enc"].astype(jnp.bfloat16),                       # (1024, 32)
        vec_pack=vec,
        w_kan_flat=p["w_kan"].reshape(KAN_FUSED, KAN_OUT),               # (128, 32)
        w_fc=p["w_fc"],                                                  # (32, 32)
        # lane-pad the 2-wide head to 128 (unmasked stores); zero columns don't change result
        w_out_pad=jnp.pad(p["w_out"], ((0, 0), (0, NOUT_PAD - N_OUT))),  # (32, 128)
    )


def reference_forward(x_img, p):
    """Pure-JAX reference replicating the PyTorch semantics (bf16 encoder weights /
    inputs matching the kernel's cast, f32 accumulation everywhere)."""
    b_in = x_img.shape[0]
    x = x_img.reshape(b_in, D_FLAT).astype(jnp.bfloat16)
    enc = jnp.dot(x, p["w_enc"].astype(jnp.bfloat16),
                  preferred_element_type=jnp.float32)
    enc = jnp.maximum(enc + p["b_enc"][None, :], 0.0)
    enc = enc / jnp.maximum(jnp.linalg.norm(enc, axis=1, keepdims=True), 1e-12)
    # KAN: (B, D_in, K) RBF kernels, contracted with (K, D_in, D_out)
    ker = jnp.exp(-((enc[:, :, None] - p["centers"][None, None, :]) ** 2)
                  / (2.0 * p["widths"][None, None, :] ** 2))
    kan = jnp.einsum("bik,kio->bo", ker, p["w_kan"]) + p["b_kan"][None, :]
    kan = jnp.maximum(kan, 0.0)
    fc = jnp.maximum(kan @ p["w_fc"] + p["b_fc"][None, :], 0.0)
    return fc @ p["w_out"] + p["b_out"][None, :]


if __name__ == "__main__":
    key = jax.random.PRNGKey(0)
    k_x, k_p = jax.random.split(key)
    x = jax.random.normal(k_x, (B, C, H, W), jnp.float32)   # NCHW image input
    params = init_params(k_p)
    kparams = prepare_kernel_params(params)

    out = predictor_forward(x, kparams)
    out = jax.block_until_ready(out)

    ref = reference_forward(x, params)
    assert out.shape == (B, N_OUT), out.shape
    assert jnp.allclose(out, ref, atol=2e-3, rtol=2e-3), (out, ref)

    print("KERNEL_OK")
</pallas_src>

<mosaic_0001>
module attributes {stable_mosaic.version = 11 : i64} {
  func.func @predictor_kernel(%arg0: i32, %arg1: memref<2x1024xf32, #tpu.memory_space<vmem>>, %arg2: memref<1024x32xbf16, #tpu.memory_space<vmem>>, %arg3: memref<8x128xf32, #tpu.memory_space<vmem>>, %arg4: memref<128x32xf32, #tpu.memory_space<vmem>>, %arg5: memref<32x32xf32, #tpu.memory_space<vmem>>, %arg6: memref<32x128xf32, #tpu.memory_space<vmem>>, %arg7: memref<2x128xf32, #tpu.memory_space<vmem>>) attributes {dimension_semantics = [#tpu.dimension_semantics<parallel>], iteration_bounds = array<i64: 1>, scalar_prefetch = 0 : i64, scratch_operands = 0 : i64, tpu.core_type = #tpu.core_type<tc>, window_params = [{transform_indices = @transform_0, window_bounds = array<i64: 2, 1024>}, {pipeline_mode = #tpu.pipeline_mode<synchronous>, transform_indices = @transform_1, window_bounds = array<i64: 1024, 32>}, {pipeline_mode = #tpu.pipeline_mode<synchronous>, transform_indices = @transform_2, window_bounds = array<i64: 8, 128>}, {pipeline_mode = #tpu.pipeline_mode<synchronous>, transform_indices = @transform_3, window_bounds = array<i64: 128, 32>}, {pipeline_mode = #tpu.pipeline_mode<synchronous>, transform_indices = @transform_4, window_bounds = array<i64: 32, 32>}, {pipeline_mode = #tpu.pipeline_mode<synchronous>, transform_indices = @transform_5, window_bounds = array<i64: 32, 128>}, {transform_indices = @transform_6, window_bounds = array<i64: 2, 128>}]} {
    %c0 = arith.constant 0 : index
    %c0_0 = arith.constant 0 : index
    %0 = vector.load %arg3[%c0, %c0_0] : memref<8x128xf32, #tpu.memory_space<vmem>>, vector<8x128xf32>
    %c0_1 = arith.constant 0 : index
    %c0_2 = arith.constant 0 : index
    %1 = vector.load %arg1[%c0_1, %c0_2] : memref<2x1024xf32, #tpu.memory_space<vmem>>, vector<2x1024xf32>
    %2 = arith.truncf %1 : vector<2x1024xf32> to vector<2x1024xbf16>
    %c0_3 = arith.constant 0 : index
    %c0_4 = arith.constant 0 : index
    %3 = vector.load %arg2[%c0_3, %c0_4] : memref<1024x32xbf16, #tpu.memory_space<vmem>>, vector<1024x32xbf16>
    %cst = arith.constant dense<0.000000e+00> : vector<2x32xf32>
    %4 = tpu.matmul %2, %3, %cst {dimension_numbers = #tpu.dot_dimension_numbers<[1], [0], [0], [1], [0, 0, 1, 1], [], []>} : vector<2x1024xbf16>, vector<1024x32xbf16>, vector<2x32xf32> -> vector<2x32xf32>
    %5 = vector.extract_strided_slice %0 {offsets = [3, 0], sizes = [1, 32], strides = [1, 1]} : vector<8x128xf32> to vector<1x32xf32>
    %6 = vector.broadcast %5 : vector<1x32xf32> to vector<2x32xf32>
    %7 = arith.addf %4, %6 : vector<2x32xf32>
    %cst_5 = arith.constant 0.000000e+00 : f32
    %8 = vector.broadcast %cst_5 : f32 to vector<2x32xf32>
    %9 = arith.maximumf %7, %8 : vector<2x32xf32>
    %10 = arith.mulf %9, %9 : vector<2x32xf32>
    %cst_6 = arith.constant dense<0.000000e+00> : vector<2xf32>
    %11 = vector.multi_reduction <add>, %10, %cst_6 [1] : vector<2x32xf32> to vector<2xf32>
    %12 = vector.shape_cast %11 : vector<2xf32> to vector<2x1xf32>
    %cst_7 = arith.constant 1.000000e-24 : f32
    %13 = vector.broadcast %cst_7 : f32 to vector<2x1xf32>
    %14 = arith.maximumf %12, %13 : vector<2x1xf32>
    %15 = math.rsqrt %14 : vector<2x1xf32>
    %16 = vector.broadcast %15 : vector<2x1xf32> to vector<2x32xf32>
    %17 = arith.mulf %9, %16 : vector<2x32xf32>
    %18 = tpu.concatenate %17, %17, %17, %17 in 1 : vector<2x32xf32>, vector<2x32xf32>, vector<2x32xf32>, vector<2x32xf32> -> vector<2x128xf32>
    %19 = vector.extract_strided_slice %0 {offsets = [0, 0], sizes = [1, 128], strides = [1, 1]} : vector<8x128xf32> to vector<1x128xf32>
    %20 = vector.broadcast %19 : vector<1x128xf32> to vector<2x128xf32>
    %21 = arith.subf %18, %20 : vector<2x128xf32>
    %22 = arith.mulf %21, %21 : vector<2x128xf32>
    %cst_8 = arith.constant 0.000000e+00 : f32
    %23 = vector.broadcast %cst_8 : f32 to vector<2x128xf32>
    %24 = arith.subf %23, %22 : vector<2x128xf32>
    %25 = vector.extract_strided_slice %0 {offsets = [1, 0], sizes = [1, 128], strides = [1, 1]} : vector<8x128xf32> to vector<1x128xf32>
    %26 = vector.broadcast %25 : vector<1x128xf32> to vector<2x128xf32>
    %27 = arith.mulf %24, %26 : vector<2x128xf32>
    %28 = math.exp %27 : vector<2x128xf32>
    %c0_9 = arith.constant 0 : index
    %c0_10 = arith.constant 0 : index
    %29 = vector.load %arg4[%c0_9, %c0_10] : memref<128x32xf32, #tpu.memory_space<vmem>>, vector<128x32xf32>
    %cst_11 = arith.constant dense<0.000000e+00> : vector<2x32xf32>
    %30 = tpu.matmul %28, %29, %cst_11 {dimension_numbers = #tpu.dot_dimension_numbers<[1], [0], [0], [1], [0, 0, 1, 1], [], []>} : vector<2x128xf32>, vector<128x32xf32>, vector<2x32xf32> -> vector<2x32xf32>
    %31 = vector.extract_strided_slice %0 {offsets = [4, 0], sizes = [1, 32], strides = [1, 1]} : vector<8x128xf32> to vector<1x32xf32>
    %32 = vector.broadcast %31 : vector<1x32xf32> to vector<2x32xf32>
    %33 = arith.addf %30, %32 : vector<2x32xf32>
    %cst_12 = arith.constant 0.000000e+00 : f32
    %34 = vector.broadcast %cst_12 : f32 to vector<2x32xf32>
    %35 = arith.maximumf %33, %34 : vector<2x32xf32>
    %c0_13 = arith.constant 0 : index
    %c0_14 = arith.constant 0 : index
    %36 = vector.load %arg5[%c0_13, %c0_14] : memref<32x32xf32, #tpu.memory_space<vmem>>, vector<32x32xf32>
    %cst_15 = arith.constant dense<0.000000e+00> : vector<2x32xf32>
    %37 = tpu.matmul %35, %36, %cst_15 {dimension_numbers = #tpu.dot_dimension_numbers<[1], [0], [0], [1], [0, 0, 1, 1], [], []>} : vector<2x32xf32>, vector<32x32xf32>, vector<2x32xf32> -> vector<2x32xf32>
    %38 = vector.extract_strided_slice %0 {offsets = [5, 0], sizes = [1, 32], strides = [1, 1]} : vector<8x128xf32> to vector<1x32xf32>
    %39 = vector.broadcast %38 : vector<1x32xf32> to vector<2x32xf32>
    %40 = arith.addf %37, %39 : vector<2x32xf32>
    %cst_16 = arith.constant 0.000000e+00 : f32
    %41 = vector.broadcast %cst_16 : f32 to vector<2x32xf32>
    %42 = arith.maximumf %40, %41 : vector<2x32xf32>
    %c0_17 = arith.constant 0 : index
    %c0_18 = arith.constant 0 : index
    %43 = vector.load %arg6[%c0_17, %c0_18] : memref<32x128xf32, #tpu.memory_space<vmem>>, vector<32x128xf32>
    %cst_19 = arith.constant dense<0.000000e+00> : vector<2x128xf32>
    %44 = tpu.matmul %42, %43, %cst_19 {dimension_numbers = #tpu.dot_dimension_numbers<[1], [0], [0], [1], [0, 0, 1, 1], [], []>} : vector<2x32xf32>, vector<32x128xf32>, vector<2x128xf32> -> vector<2x128xf32>
    %45 = vector.extract_strided_slice %0 {offsets = [2, 0], sizes = [1, 128], strides = [1, 1]} : vector<8x128xf32> to vector<1x128xf32>
    %46 = vector.broadcast %45 : vector<1x128xf32> to vector<2x128xf32>
    %47 = arith.addf %44, %46 : vector<2x128xf32>
    %c0_20 = arith.constant 0 : index
    %c0_21 = arith.constant 0 : index
    %48 = vector.load %arg7[%c0_20, %c0_21] : memref<2x128xf32, #tpu.memory_space<vmem>>, vector<2x128xf32>
    tpu.vector_store %arg7[%c0_20, %c0_21], %47 {strides = array<i32>} : memref<2x128xf32, #tpu.memory_space<vmem>>, vector<2x128xf32>,
    return
  }
  func.func @transform_0(%arg0: i32) -> (i32, i32) {
    %c0_i32 = arith.constant 0 : i32
    %c0_i32_0 = arith.constant 0 : i32
    return %arg0, %c0_i32 : i32, i32
  }
  func.func @transform_1(%arg0: i32) -> (i32, i32) {
    %c0_i32 = arith.constant 0 : i32
    %c0_i32_0 = arith.constant 0 : i32
    %c0_i32_1 = arith.constant 0 : i32
    return %c0_i32, %c0_i32_0 : i32, i32
  }
  func.func @transform_2(%arg0: i32) -> (i32, i32) {
    %c0_i32 = arith.constant 0 : i32
    %c0_i32_0 = arith.constant 0 : i32
    %c0_i32_1 = arith.constant 0 : i32
    return %c0_i32, %c0_i32_0 : i32, i32
  }
  func.func @transform_3(%arg0: i32) -> (i32, i32) {
    %c0_i32 = arith.constant 0 : i32
    %c0_i32_0 = arith.constant 0 : i32
    %c0_i32_1 = arith.constant 0 : i32
    return %c0_i32, %c0_i32_0 : i32, i32
  }
  func.func @transform_4(%arg0: i32) -> (i32, i32) {
    %c0_i32 = arith.constant 0 : i32
    %c0_i32_0 = arith.constant 0 : i32
    %c0_i32_1 = arith.constant 0 : i32
    return %c0_i32, %c0_i32_0 : i32, i32
  }
  func.func @transform_5(%arg0: i32) -> (i32, i32) {
    %c0_i32 = arith.constant 0 : i32
    %c0_i32_0 = arith.constant 0 : i32
    %c0_i32_1 = arith.constant 0 : i32
    return %c0_i32, %c0_i32_0 : i32, i32
  }
  func.func @transform_6(%arg0: i32) -> (i32, i32) {
    %c0_i32 = arith.constant 0 : i32
    %c0_i32_0 = arith.constant 0 : i32
    return %arg0, %c0_i32 : i32, i32
  }
}

</mosaic_0001>

<llo_original>
// kernel: predictor_forward.1
$region0: #{predictor_forward.1}
  #allocation0 [shape = 'u32[]', space=smem, size = 0x4, offset = 0x4, fixed_abs, tag = 'smem constant byte address 0x4 - core index']
  #allocation1 [shape = 'u32[144,128]{1,0:T(1,128)}', space=vmem, size = 0x12000, scoped, tag = 'internal scratch']
  %s0 = inlined_call_operand.vmem [shape: f32[2,1024], index: 0, kind: input, shape index: {}]
  %s1 = inlined_call_operand.vmem [shape: bf16[1024,32], index: 1, kind: input, shape index: {}]
  %s2 = inlined_call_operand.vmem [shape: f32[8,128], index: 2, kind: input, shape index: {}]
  %s3 = inlined_call_operand.vmem [shape: f32[128,32], index: 3, kind: input, shape index: {}]
  %s4 = inlined_call_operand.vmem [shape: f32[32,32], index: 4, kind: input, shape index: {}]
  %s5 = inlined_call_operand.vmem [shape: f32[32,128], index: 5, kind: input, shape index: {}]
  %s6 = inlined_call_operand.hbm [shape: f32[2,128], index: 6, kind: output, shape index: {}]
  %s7 = sld [smem:[#allocation0]]
  $region34: #{predictor_forward.1} parent=0
    _
  %s9 = ssub.s32 1, %s7
  %s10 = scalar_select 0, %s9, %s7
  $region1: #{predictor_forward.1} parent=0
    #allocation2 [shape = 'u8[1024]{0}', space=vmem, size = 0x400, scoped, tag = 'output window, operand 0, single buffered']
    #allocation3 [shape = 's32[1]{0}', space=sflag, size = 0x4, scoped, tag = 'scoped memory for predictor_forward.1']
    %11 = vsyncpa [#allocation3], 0
    // Predicated region
    $region2: #{predictor_forward.1} parent=1 // pred_check
      _
    $region3: #{predictor_forward.1} parent=1 // pred_check_branch
      %13 = sbr.rel (0) target = $region5
    $region4: #{predictor_forward.1} parent=1 // pred_region
      _
    $region5: #{predictor_forward.1} parent=1 // pred_fallthru
      _
    // Predicated region
    $region6: #{predictor_forward.1} parent=1 // pred_check
      _
    $region7: #{predictor_forward.1} parent=1 // pred_check_branch
      %15 = sbr.rel (0) target = $region9
    $region8: #{predictor_forward.1} parent=1 // pred_region
      _
    $region9: #{predictor_forward.1} parent=1 // pred_fallthru
      _
    // Predicated region
    $region10: #{predictor_forward.1} parent=1 // pred_check
      _
    $region11: #{predictor_forward.1} parent=1 // pred_check_branch
      %17 = sbr.rel (0) target = $region13
    $region12: #{predictor_forward.1} parent=1 // pred_region
      _
    $region13: #{predictor_forward.1} parent=1 // pred_fallthru
      _
    // Predicated region
    $region14: #{predictor_forward.1} parent=1 // pred_check
      _
    $region15: #{predictor_forward.1} parent=1 // pred_check_branch
      %19 = sbr.rel (0) target = $region17
    $region16: #{predictor_forward.1} parent=1 // pred_region
      _
    $region17: #{predictor_forward.1} parent=1 // pred_fallthru
      _
    // Predicated region
    $region18: #{predictor_forward.1} parent=1 // pred_check
      _
    $region19: #{predictor_forward.1} parent=1 // pred_check_branch
      %21 = sbr.rel (0) target = $region21
    $region20: #{predictor_forward.1} parent=1 // pred_region
      _
    $region21: #{predictor_forward.1} parent=1 // pred_fallthru
      _
    // Predicated region
    $region22: #{predictor_forward.1} parent=1 // pred_check
      _
    $region23: #{predictor_forward.1} parent=1 // pred_check_branch
      %23 = sbr.rel (0) target = $region25
    $region24: #{predictor_forward.1} parent=1 // pred_region
      _
    $region25: #{predictor_forward.1} parent=1 // pred_fallthru
      _
    %v25 = vld [vmem:[%s2] sm:$0xff]
    %v26 = vld [vmem:[%s0] sm:$0xff]
    %v27 = vld [vmem:[%s0 + $0x8] sm:$0xff]
    %v30 = vcombine.high %v26, %v26
    %v32 = vunpack.c.l.s4 1983009808
    %v33 = vunpack.c.0.s8 %v32
    %v34 = vlaneseq
    %v35 = vshrl.u32 %v34, 7
    %v36 = vsub.s32 %v33, %v35
    %v37 = vrot.slane %v26, %v36
    %v39 = vunpack.c.l.s4 1983009808
    %v40 = vunpack.c.0.s8 %v39
    %v41 = vlaneseq
    %v42 = vshrl.u32 %v41, 7
    %v43 = vsub.s32 %v40, %v42
    %v44 = vrot.slane %v30, %v43
    %v45 = vcombine.high %v37, %v37
    %v46 = vcombine.high %v44, %v44
    %v47 = vcombine.high %v27, %v27
    %v49 = vunpack.c.l.s4 1983009808
    %v50 = vunpack.c.0.s8 %v49
    %v51 = vlaneseq
    %v52 = vshrl.u32 %v51, 7
    %v53 = vsub.s32 %v50, %v52
    %v54 = vrot.slane %v27, %v53
    %v56 = vunpack.c.l.s4 1983009808
    %v57 = vunpack.c.0.s8 %v56
    %v58 = vlaneseq
    %v59 = vshrl.u32 %v58, 7
    %v60 = vsub.s32 %v57, %v59
    %v61 = vrot.slane %v47, %v60
    %v62 = vcombine.high %v54, %v54
    %v63 = vcombine.high %v61, %v61
    %v72 = vpack.c.bf16 %v37, %v37
    %v73 = vpack.c.bf16 %v45, %v45
    %v74 = vpack.c.bf16 %v44, %v44
    %v75 = vpack.c.bf16 %v46, %v46
    %v76 = vpack.c.bf16 %v54, %v54
    %v77 = vpack.c.bf16 %v62, %v62
    %v78 = vpack.c.bf16 %v61, %v61
    %v79 = vpack.c.bf16 %v63, %v63
    %v80 = vld [vmem:[%s1] sm:$0xf]
    %v81 = vld [vmem:[%s1 + $0x4] sm:$0xf]
    %v82 = vld [vmem:[%s1 + $0x8] sm:$0xf]
    %v83 = vld [vmem:[%s1 + $0xc] sm:$0xf]
    %v84 = vld [vmem:[%s1 + $0x10] sm:$0xf]
    %v85 = vld [vmem:[%s1 + $0x14] sm:$0xf]
    %v86 = vld [vmem:[%s1 + $0x18] sm:$0xf]
    %v87 = vld [vmem:[%s1 + $0x1c] sm:$0xf]
    %v88 = vld [vmem:[%s1 + $0x20] sm:$0xf]
    %v89 = vld [vmem:[%s1 + $0x24] sm:$0xf]
    %v90 = vld [vmem:[%s1 + $0x28] sm:$0xf]
    %v91 = vld [vmem:[%s1 + $0x2c] sm:$0xf]
    %v92 = vld [vmem:[%s1 + $0x30] sm:$0xf]
    %v93 = vld [vmem:[%s1 + $0x34] sm:$0xf]
    %v94 = vld [vmem:[%s1 + $0x38] sm:$0xf]
    %v95 = vld [vmem:[%s1 + $0x3c] sm:$0xf]
    %v96 = vld [vmem:[%s1 + $0x40] sm:$0xf]
    %v97 = vld [vmem:[%s1 + $0x44] sm:$0xf]
    %v98 = vld [vmem:[%s1 + $0x48] sm:$0xf]
    %v99 = vld [vmem:[%s1 + $0x4c] sm:$0xf]
    %v100 = vld [vmem:[%s1 + $0x50] sm:$0xf]
    %v101 = vld [vmem:[%s1 + $0x54] sm:$0xf]
    %v102 = vld [vmem:[%s1 + $0x58] sm:$0xf]
    %v103 = vld [vmem:[%s1 + $0x5c] sm:$0xf]
    %v104 = vld [vmem:[%s1 + $0x60] sm:$0xf]
    %v105 = vld [vmem:[%s1 + $0x64] sm:$0xf]
    %v106 = vld [vmem:[%s1 + $0x68] sm:$0xf]
    %v107 = vld [vmem:[%s1 + $0x6c] sm:$0xf]
    %v108 = vld [vmem:[%s1 + $0x70] sm:$0xf]
    %v109 = vld [vmem:[%s1 + $0x74] sm:$0xf]
    %v110 = vld [vmem:[%s1 + $0x78] sm:$0xf]
    %v111 = vld [vmem:[%s1 + $0x7c] sm:$0xf]
    %v112 = vld [vmem:[%s1 + $0x80] sm:$0xf]
    %v113 = vld [vmem:[%s1 + $0x84] sm:$0xf]
    %v114 = vld [vmem:[%s1 + $0x88] sm:$0xf]
    %v115 = vld [vmem:[%s1 + $0x8c] sm:$0xf]
    %v116 = vld [vmem:[%s1 + $0x90] sm:$0xf]
    %v117 = vld [vmem:[%s1 + $0x94] sm:$0xf]
    %v118 = vld [vmem:[%s1 + $0x98] sm:$0xf]
    %v119 = vld [vmem:[%s1 + $0x9c] sm:$0xf]
    %v120 = vld [vmem:[%s1 + $0xa0] sm:$0xf]
    %v121 = vld [vmem:[%s1 + $0xa4] sm:$0xf]
    %v122 = vld [vmem:[%s1 + $0xa8] sm:$0xf]
    %v123 = vld [vmem:[%s1 + $0xac] sm:$0xf]
    %v124 = vld [vmem:[%s1 + $0xb0] sm:$0xf]
    %v125 = vld [vmem:[%s1 + $0xb4] sm:$0xf]
    %v126 = vld [vmem:[%s1 + $0xb8] sm:$0xf]
    %v127 = vld [vmem:[%s1 + $0xbc] sm:$0xf]
    %v128 = vld [vmem:[%s1 + $0xc0] sm:$0xf]
    %v129 = vld [vmem:[%s1 + $0xc4] sm:$0xf]
    %v130 = vld [vmem:[%s1 + $0xc8] sm:$0xf]
    %v131 = vld [vmem:[%s1 + $0xcc] sm:$0xf]
    %v132 = vld [vmem:[%s1 + $0xd0] sm:$0xf]
    %v133 = vld [vmem:[%s1 + $0xd4] sm:$0xf]
    %v134 = vld [vmem:[%s1 + $0xd8] sm:$0xf]
    %v135 = vld [vmem:[%s1 + $0xdc] sm:$0xf]
    %v136 = vld [vmem:[%s1 + $0xe0] sm:$0xf]
    %v137 = vld [vmem:[%s1 + $0xe4] sm:$0xf]
    %v138 = vld [vmem:[%s1 + $0xe8] sm:$0xf]
    %v139 = vld [vmem:[%s1 + $0xec] sm:$0xf]
    %v140 = vld [vmem:[%s1 + $0xf0] sm:$0xf]
    %v141 = vld [vmem:[%s1 + $0xf4] sm:$0xf]
    %v142 = vld [vmem:[%s1 + $0xf8] sm:$0xf]
    %v143 = vld [vmem:[%s1 + $0xfc] sm:$0xf]
    %v144 = vld [vmem:[%s1 + $0x100] sm:$0xf]
    %v145 = vld [vmem:[%s1 + $0x104] sm:$0xf]
    %v146 = vld [vmem:[%s1 + $0x108] sm:$0xf]
    %v147 = vld [vmem:[%s1 + $0x10c] sm:$0xf]
    %v148 = vld [vmem:[%s1 + $0x110] sm:$0xf]
    %v149 = vld [vmem:[%s1 + $0x114] sm:$0xf]
    %v150 = vld [vmem:[%s1 + $0x118] sm:$0xf]
    %v151 = vld [vmem:[%s1 + $0x11c] sm:$0xf]
    %v152 = vld [vmem:[%s1 + $0x120] sm:$0xf]
    %v153 = vld [vmem:[%s1 + $0x124] sm:$0xf]
    %v154 = vld [vmem:[%s1 + $0x128] sm:$0xf]
    %v155 = vld [vmem:[%s1 + $0x12c] sm:$0xf]
    %v156 = vld [vmem:[%s1 + $0x130] sm:$0xf]
    %v157 = vld [vmem:[%s1 + $0x134] sm:$0xf]
    %v158 = vld [vmem:[%s1 + $0x138] sm:$0xf]
    %v159 = vld [vmem:[%s1 + $0x13c] sm:$0xf]
    %v160 = vld [vmem:[%s1 + $0x140] sm:$0xf]
    %v161 = vld [vmem:[%s1 + $0x144] sm:$0xf]
    %v162 = vld [vmem:[%s1 + $0x148] sm:$0xf]
    %v163 = vld [vmem:[%s1 + $0x14c] sm:$0xf]
    %v164 = vld [vmem:[%s1 + $0x150] sm:$0xf]
    %v165 = vld [vmem:[%s1 + $0x154] sm:$0xf]
    %v166 = vld [vmem:[%s1 + $0x158] sm:$0xf]
    %v167 = vld [vmem:[%s1 + $0x15c] sm:$0xf]
    %v168 = vld [vmem:[%s1 + $0x160] sm:$0xf]
    %v169 = vld [vmem:[%s1 + $0x164] sm:$0xf]
    %v170 = vld [vmem:[%s1 + $0x168] sm:$0xf]
    %v171 = vld [vmem:[%s1 + $0x16c] sm:$0xf]
    %v172 = vld [vmem:[%s1 + $0x170] sm:$0xf]
    %v173 = vld [vmem:[%s1 + $0x174] sm:$0xf]
    %v174 = vld [vmem:[%s1 + $0x178] sm:$0xf]
    %v175 = vld [vmem:[%s1 + $0x17c] sm:$0xf]
    %v176 = vld [vmem:[%s1 + $0x180] sm:$0xf]
    %v177 = vld [vmem:[%s1 + $0x184] sm:$0xf]
    %v178 = vld [vmem:[%s1 + $0x188] sm:$0xf]
    %v179 = vld [vmem:[%s1 + $0x18c] sm:$0xf]
    %v180 = vld [vmem:[%s1 + $0x190] sm:$0xf]
    %v181 = vld [vmem:[%s1 + $0x194] sm:$0xf]
    %v182 = vld [vmem:[%s1 + $0x198] sm:$0xf]
    %v183 = vld [vmem:[%s1 + $0x19c] sm:$0xf]
    %v184 = vld [vmem:[%s1 + $0x1a0] sm:$0xf]
    %v185 = vld [vmem:[%s1 + $0x1a4] sm:$0xf]
    %v186 = vld [vmem:[%s1 + $0x1a8] sm:$0xf]
    %v187 = vld [vmem:[%s1 + $0x1ac] sm:$0xf]
    %v188 = vld [vmem:[%s1 + $0x1b0] sm:$0xf]
    %v189 = vld [vmem:[%s1 + $0x1b4] sm:$0xf]
    %v190 = vld [vmem:[%s1 + $0x1b8] sm:$0xf]
    %v191 = vld [vmem:[%s1 + $0x1bc] sm:$0xf]
    %v192 = vld [vmem:[%s1 + $0x1c0] sm:$0xf]
    %v193 = vld [vmem:[%s1 + $0x1c4] sm:$0xf]
    %v194 = vld [vmem:[%s1 + $0x1c8] sm:$0xf]
    %v195 = vld [vmem:[%s1 + $0x1cc] sm:$0xf]
    %v196 = vld [vmem:[%s1 + $0x1d0] sm:$0xf]
    %v197 = vld [vmem:[%s1 + $0x1d4] sm:$0xf]
    %v198 = vld [vmem:[%s1 + $0x1d8] sm:$0xf]
    %v199 = vld [vmem:[%s1 + $0x1dc] sm:$0xf]
    %v200 = vld [vmem:[%s1 + $0x1e0] sm:$0xf]
    %v201 = vld [vmem:[%s1 + $0x1e4] sm:$0xf]
    %v202 = vld [vmem:[%s1 + $0x1e8] sm:$0xf]
    %v203 = vld [vmem:[%s1 + $0x1ec] sm:$0xf]
    %v204 = vld [vmem:[%s1 + $0x1f0] sm:$0xf]
    %v205 = vld [vmem:[%s1 + $0x1f4] sm:$0xf]
    %v206 = vld [vmem:[%s1 + $0x1f8] sm:$0xf]
    %v207 = vld [vmem:[%s1 + $0x1fc] sm:$0xf]
    %v208 = vlaneseq
    %v209 = vshrl.u32 %v208, 7
    %v210 = vsub.s32 3, %v209
    %v211 = vrot.slane %v25, %v210
    %v340 = vunpack.c.l.b16 %v80
    %v341 = vunpack.c.l.b16 %v81
    %v342 = vunpack.c.l.b16 %v82
    %v343 = vunpack.c.l.b16 %v83
    %v344 = vunpack.c.l.b16 %v84
    %v345 = vunpack.c.l.b16 %v85
    %v346 = vunpack.c.l.b16 %v86
    %v347 = vunpack.c.l.b16 %v87
    %v348 = vunpack.c.l.b16 %v88
    %v349 = vunpack.c.l.b16 %v89
    %v350 = vunpack.c.l.b16 %v90
    %v351 = vunpack.c.l.b16 %v91
    %v352 = vunpack.c.l.b16 %v92
    %v353 = vunpack.c.l.b16 %v93
    %v354 = vunpack.c.l.b16 %v94
    %v355 = vunpack.c.l.b16 %v95
    %v356 = vunpack.c.l.b16 %v96
    %v357 = vunpack.c.l.b16 %v97
    %v358 = vunpack.c.l.b16 %v98
    %v359 = vunpack.c.l.b16 %v99
    %v360 = vunpack.c.l.b16 %v100
    %v361 = vunpack.c.l.b16 %v101
    %v362 = vunpack.c.l.b16 %v102
    %v363 = vunpack.c.l.b16 %v103
    %v364 = vunpack.c.l.b16 %v104
    %v365 = vunpack.c.l.b16 %v105
    %v366 = vunpack.c.l.b16 %v106
    %v367 = vunpack.c.l.b16 %v107
    %v368 = vunpack.c.l.b16 %v108
    %v369 = vunpack.c.l.b16 %v109
    %v370 = vunpack.c.l.b16 %v110
    %v371 = vunpack.c.l.b16 %v111
    %v372 = vunpack.c.l.b16 %v112
    %v373 = vunpack.c.l.b16 %v113
    %v374 = vunpack.c.l.b16 %v114
    %v375 = vunpack.c.l.b16 %v115
    %v376 = vunpack.c.l.b16 %v116
    %v377 = vunpack.c.l.b16 %v117
    %v378 = vunpack.c.l.b16 %v118
    %v379 = vunpack.c.l.b16 %v119
    %v380 = vunpack.c.l.b16 %v120
    %v381 = vunpack.c.l.b16 %v121
    %v382 = vunpack.c.l.b16 %v122
    %v383 = vunpack.c.l.b16 %v123
    %v384 = vunpack.c.l.b16 %v124
    %v385 = vunpack.c.l.b16 %v125
    %v386 = vunpack.c.l.b16 %v126
    %v387 = vunpack.c.l.b16 %v127
    %v388 = vunpack.c.l.b16 %v128
    %v389 = vunpack.c.l.b16 %v129
    %v390 = vunpack.c.l.b16 %v130
    %v391 = vunpack.c.l.b16 %v131
    %v392 = vunpack.c.l.b16 %v132
    %v393 = vunpack.c.l.b16 %v133
    %v394 = vunpack.c.l.b16 %v134
    %v395 = vunpack.c.l.b16 %v135
    %v396 = vunpack.c.l.b16 %v136
    %v397 = vunpack.c.l.b16 %v137
    %v398 = vunpack.c.l.b16 %v138
    %v399 = vunpack.c.l.b16 %v139
    %v400 = vunpack.c.l.b16 %v140
    %v401 = vunpack.c.l.b16 %v141
    %v402 = vunpack.c.l.b16 %v142
    %v403 = vunpack.c.l.b16 %v143
    %v404 = vunpack.c.l.b16 %v144
    %v405 = vunpack.c.l.b16 %v145
    %v406 = vunpack.c.l.b16 %v146
    %v407 = vunpack.c.l.b16 %v147
    %v408 = vunpack.c.l.b16 %v148
    %v409 = vunpack.c.l.b16 %v149
    %v410 = vunpack.c.l.b16 %v150
    %v411 = vunpack.c.l.b16 %v151
    %v412 = vunpack.c.l.b16 %v152
    %v413 = vunpack.c.l.b16 %v153
    %v414 = vunpack.c.l.b16 %v154
    %v415 = vunpack.c.l.b16 %v155
    %v416 = vunpack.c.l.b16 %v156
    %v417 = vunpack.c.l.b16 %v157
    %v418 = vunpack.c.l.b16 %v158
    %v419 = vunpack.c.l.b16 %v159
    %v420 = vunpack.c.l.b16 %v160
    %v421 = vunpack.c.l.b16 %v161
    %v422 = vunpack.c.l.b16 %v162
    %v423 = vunpack.c.l.b16 %v163
    %v424 = vunpack.c.l.b16 %v164
    %v425 = vunpack.c.l.b16 %v165
    %v426 = vunpack.c.l.b16 %v166
    %v427 = vunpack.c.l.b16 %v167
    %v428 = vunpack.c.l.b16 %v168
    %v429 = vunpack.c.l.b16 %v169
    %v430 = vunpack.c.l.b16 %v170
    %v431 = vunpack.c.l.b16 %v171
    %v432 = vunpack.c.l.b16 %v172
    %v433 = vunpack.c.l.b16 %v173
    %v434 = vunpack.c.l.b16 %v174
    %v435 = vunpack.c.l.b16 %v175
    %v436 = vunpack.c.l.b16 %v176
    %v437 = vunpack.c.l.b16 %v177
    %v438 = vunpack.c.l.b16 %v178
    %v439 = vunpack.c.l.b16 %v179
    %v440 = vunpack.c.l.b16 %v180
    %v441 = vunpack.c.l.b16 %v181
    %v442 = vunpack.c.l.b16 %v182
    %v443 = vunpack.c.l.b16 %v183
    %v444 = vunpack.c.l.b16 %v184
    %v445 = vunpack.c.l.b16 %v185
    %v446 = vunpack.c.l.b16 %v186
    %v447 = vunpack.c.l.b16 %v187
    %v448 = vunpack.c.l.b16 %v188
    %v449 = vunpack.c.l.b16 %v189
    %v450 = vunpack.c.l.b16 %v190
    %v451 = vunpack.c.l.b16 %v191
    %v452 = vunpack.c.l.b16 %v192
    %v453 = vunpack.c.l.b16 %v193
    %v454 = vunpack.c.l.b16 %v194
    %v455 = vunpack.c.l.b16 %v195
    %v456 = vunpack.c.l.b16 %v196
    %v457 = vunpack.c.l.b16 %v197
    %v458 = vunpack.c.l.b16 %v198
    %v459 = vunpack.c.l.b16 %v199
    %v460 = vunpack.c.l.b16 %v200
    %v461 = vunpack.c.l.b16 %v201
    %v462 = vunpack.c.l.b16 %v202
    %v463 = vunpack.c.l.b16 %v203
    %v464 = vunpack.c.l.b16 %v204
    %v465 = vunpack.c.l.b16 %v205
    %v466 = vunpack.c.l.b16 %v206
    %v467 = vunpack.c.l.b16 %v207
    %v468 = vpack.c.b16 %v341, %v340
    %v469 = vpack.c.b16 %v343, %v342
    %v470 = vpack.c.b16 %v345, %v344
    %v471 = vpack.c.b16 %v347, %v346
    %v472 = vpack.c.b16 %v349, %v348
    %v473 = vpack.c.b16 %v351, %v350
    %v474 = vpack.c.b16 %v353, %v352
    %v475 = vpack.c.b16 %v355, %v354
    %v476 = vpack.c.b16 %v357, %v356
    %v477 = vpack.c.b16 %v359, %v358
    %v478 = vpack.c.b16 %v361, %v360
    %v479 = vpack.c.b16 %v363, %v362
    %v480 = vpack.c.b16 %v365, %v364
    %v481 = vpack.c.b16 %v367, %v366
    %v482 = vpack.c.b16 %v369, %v368
    %v483 = vpack.c.b16 %v371, %v370
    %v484 = vpack.c.b16 %v373, %v372
    %v485 = vpack.c.b16 %v375, %v374
    %v486 = vpack.c.b16 %v377, %v376
    %v487 = vpack.c.b16 %v379, %v378
    %v488 = vpack.c.b16 %v381, %v380
    %v489 = vpack.c.b16 %v383, %v382
    %v490 = vpack.c.b16 %v385, %v384
    %v491 = vpack.c.b16 %v387, %v386
    %v492 = vpack.c.b16 %v389, %v388
    %v493 = vpack.c.b16 %v391, %v390
    %v494 = vpack.c.b16 %v393, %v392
    %v495 = vpack.c.b16 %v395, %v394
    %v496 = vpack.c.b16 %v397, %v396
    %v497 = vpack.c.b16 %v399, %v398
    %v498 = vpack.c.b16 %v401, %v400
    %v499 = vpack.c.b16 %v403, %v402
    %v500 = vpack.c.b16 %v405, %v404
    %v501 = vpack.c.b16 %v407, %v406
    %v502 = vpack.c.b16 %v409, %v408
    %v503 = vpack.c.b16 %v411, %v410
    %v504 = vpack.c.b16 %v413, %v412
    %v505 = vpack.c.b16 %v415, %v414
    %v506 = vpack.c.b16 %v417, %v416
    %v507 = vpack.c.b16 %v419, %v418
    %v508 = vpack.c.b16 %v421, %v420
    %v509 = vpack.c.b16 %v423, %v422
    %v510 = vpack.c.b16 %v425, %v424
    %v511 = vpack.c.b16 %v427, %v426
    %v512 = vpack.c.b16 %v429, %v428
    %v513 = vpack.c.b16 %v431, %v430
    %v514 = vpack.c.b16 %v433, %v432
    %v515 = vpack.c.b16 %v435, %v434
    %v516 = vpack.c.b16 %v437, %v436
    %v517 = vpack.c.b16 %v439, %v438
    %v518 = vpack.c.b16 %v441, %v440
    %v519 = vpack.c.b16 %v443, %v442
    %v520 = vpack.c.b16 %v445, %v444
    %v521 = vpack.c.b16 %v447, %v446
    %v522 = vpack.c.b16 %v449, %v448
    %v523 = vpack.c.b16 %v451, %v450
    %v524 = vpack.c.b16 %v453, %v452
    %v525 = vpack.c.b16 %v455, %v454
    %v526 = vpack.c.b16 %v457, %v456
    %v527 = vpack.c.b16 %v459, %v458
    %v528 = vpack.c.b16 %v461, %v460
    %v529 = vpack.c.b16 %v463, %v462
    %v530 = vpack.c.b16 %v465, %v464
    %v531 = vpack.c.b16 %v467, %v466
    %596 = vmatprep.subr.bf16.mxu0 0
    %597 = vmatpush1.bf16.msra.mxu0 %v468
    %598 = vmatprep.subr.bf16.mxu0 0
    %599 = vmatpush1.bf16.msra.mxu0 %v469
    %600 = vmatprep.subr.bf16.mxu0 0
    %601 = vmatpush1.bf16.msra.mxu0 %v470
    %602 = vmatprep.subr.bf16.mxu0 0
    %603 = vmatpush1.bf16.msra.mxu0 %v471
    %604 = vmatprep.subr.bf16.mxu0 0
    %605 = vmatpush1.bf16.msra.mxu0 %v472
    %606 = vmatprep.subr.bf16.mxu0 0
    %607 = vmatpush1.bf16.msra.mxu0 %v473
    %608 = vmatprep.subr.bf16.mxu0 0
    %609 = vmatpush1.bf16.msra.mxu0 %v474
    %610 = vmatprep.subr.bf16.mxu0 0
    %611 = vmatpush1.bf16.msra.mxu0 %v475
    %612 = vmatprep.subr.bf16.mxu0 0
    %613 = vmatpush1.bf16.msra.mxu0 %v476
    %614 = vmatprep.subr.bf16.mxu0 0
    %615 = vmatpush1.bf16.msra.mxu0 %v477
    %616 = vmatprep.subr.bf16.mxu0 0
    %617 = vmatpush1.bf16.msra.mxu0 %v478
    %618 = vmatprep.subr.bf16.mxu0 0
    %619 = vmatpush1.bf16.msra.mxu0 %v479
    %620 = vmatprep.subr.bf16.mxu0 0
    %621 = vmatpush1.bf16.msra.mxu0 %v480
    %622 = vmatprep.subr.bf16.mxu0 0
    %623 = vmatpush1.bf16.msra.mxu0 %v481
    %624 = vmatprep.subr.bf16.mxu0 0
    %625 = vmatpush1.bf16.msra.mxu0 %v482
    %626 = vmatprep.subr.bf16.mxu0 0
    %627 = vmatpush1.bf16.msra.mxu0 %v483
    %628 = vmatprep.mubr.bf16.mxu0 %v73
    %629 = vmatmul.mubr.bf16.gmra.mrb[0].mxu0 %v72
    %v630 = vpop.f32.mrb[0].mxu0
    %v631 = vadd.f32 %v211, %v630
    %v632 = vpop.f32.mrb[0].mxu0
    %v633 = vpop.f32.mrb[0].mxu0
    %v634 = vpop.f32.mrb[0].mxu0
    %635 = vdwg.mxu0
    %636 = vmatprep.subr.bf16.mxu0 0
    %637 = vmatpush1.bf16.msra.mxu0 %v484
    %638 = vmatprep.subr.bf16.mxu0 0
    %639 = vmatpush1.bf16.msra.mxu0 %v485
    %640 = vmatprep.subr.bf16.mxu0 0
    %641 = vmatpush1.bf16.msra.mxu0 %v486
    %642 = vmatprep.subr.bf16.mxu0 0
    %643 = vmatpush1.bf16.msra.mxu0 %v487
    %644 = vmatprep.subr.bf16.mxu0 0
    %645 = vmatpush1.bf16.msra.mxu0 %v488
    %646 = vmatprep.subr.bf16.mxu0 0
    %647 = vmatpush1.bf16.msra.mxu0 %v489
    %648 = vmatprep.subr.bf16.mxu0 0
    %649 = vmatpush1.bf16.msra.mxu0 %v490
    %650 = vmatprep.subr.bf16.mxu0 0
    %651 = vmatpush1.bf16.msra.mxu0 %v491
    %652 = vmatprep.subr.bf16.mxu0 0
    %653 = vmatpush1.bf16.msra.mxu0 %v492
    %654 = vmatprep.subr.bf16.mxu0 0
    %655 = vmatpush1.bf16.msra.mxu0 %v493
    %656 = vmatprep.subr.bf16.mxu0 0
    %657 = vmatpush1.bf16.msra.mxu0 %v494
    %658 = vmatprep.subr.bf16.mxu0 0
    %659 = vmatpush1.bf16.msra.mxu0 %v495
    %660 = vmatprep.subr.bf16.mxu0 0
    %661 = vmatpush1.bf16.msra.mxu0 %v496
    %662 = vmatprep.subr.bf16.mxu0 0
    %663 = vmatpush1.bf16.msra.mxu0 %v497
    %664 = vmatprep.subr.bf16.mxu0 0
    %665 = vmatpush1.bf16.msra.mxu0 %v498
    %666 = vmatprep.subr.bf16.mxu0 0
    %667 = vmatpush1.bf16.msra.mxu0 %v499
    %668 = vmatprep.mubr.bf16.mxu0 %v75
    %669 = vmatmul.mubr.bf16.gmra.mrb[0].mxu0 %v74
    %v670 = vpop.f32.mrb[0].mxu0
    %v671 = vadd.f32 %v631, %v670
    %v672 = vpop.f32.mrb[0].mxu0
    %v673 = vpop.f32.mrb[0].mxu0
    %v674 = vpop.f32.mrb[0].mxu0
    %675 = vdwg.mxu0
    %676 = vmatprep.subr.bf16.mxu0 0
    %677 = vmatpush1.bf16.msra.mxu0 %v500
    %678 = vmatprep.subr.bf16.mxu0 0
    %679 = vmatpush1.bf16.msra.mxu0 %v501
    %680 = vmatprep.subr.bf16.mxu0 0
    %681 = vmatpush1.bf16.msra.mxu0 %v502
    %682 = vmatprep.subr.bf16.mxu0 0
    %683 = vmatpush1.bf16.msra.mxu0 %v503
    %684 = vmatprep.subr.bf16.mxu0 0
    %685 = vmatpush1.bf16.msra.mxu0 %v504
    %686 = vmatprep.subr.bf16.mxu0 0
    %687 = vmatpush1.bf16.msra.mxu0 %v505
    %688 = vmatprep.subr.bf16.mxu0 0
    %689 = vmatpush1.bf16.msra.mxu0 %v506
    %690 = vmatprep.subr.bf16.mxu0 0
    %691 = vmatpush1.bf16.msra.mxu0 %v507
    %692 = vmatprep.subr.bf16.mxu0 0
    %693 = vmatpush1.bf16.msra.mxu0 %v508
    %694 = vmatprep.subr.bf16.mxu0 0
    %695 = vmatpush1.bf16.msra.mxu0 %v509
    %696 = vmatprep.subr.bf16.mxu0 0
    %697 = vmatpush1.bf16.msra.mxu0 %v510
    %698 = vmatprep.subr.bf16.mxu0 0
    %699 = vmatpush1.bf16.msra.mxu0 %v511
    %700 = vmatprep.subr.bf16.mxu0 0
    %701 = vmatpush1.bf16.msra.mxu0 %v512
    %702 = vmatprep.subr.bf16.mxu0 0
    %703 = vmatpush1.bf16.msra.mxu0 %v513
    %704 = vmatprep.subr.bf16.mxu0 0
    %705 = vmatpush1.bf16.msra.mxu0 %v514
    %706 = vmatprep.subr.bf16.mxu0 0
    %707 = vmatpush1.bf16.msra.mxu0 %v515
    %708 = vmatprep.mubr.bf16.mxu0 %v77
    %709 = vmatmul.mubr.bf16.gmra.mrb[0].mxu0 %v76
    %v710 = vpop.f32.mrb[0].mxu0
    %v711 = vadd.f32 %v671, %v710
    %v712 = vpop.f32.mrb[0].mxu0
    %v713 = vpop.f32.mrb[0].mxu0
    %v714 = vpop.f32.mrb[0].mxu0
    %715 = vdwg.mxu0
    %716 = vmatprep.subr.bf16.mxu0 0
    %717 = vmatpush1.bf16.msra.mxu0 %v516
    %718 = vmatprep.subr.bf16.mxu0 0
    %719 = vmatpush1.bf16.msra.mxu0 %v517
    %720 = vmatprep.subr.bf16.mxu0 0
    %721 = vmatpush1.bf16.msra.mxu0 %v518
    %722 = vmatprep.subr.bf16.mxu0 0
    %723 = vmatpush1.bf16.msra.mxu0 %v519
    %724 = vmatprep.subr.bf16.mxu0 0
    %725 = vmatpush1.bf16.msra.mxu0 %v520
    %726 = vmatprep.subr.bf16.mxu0 0
    %727 = vmatpush1.bf16.msra.mxu0 %v521
    %728 = vmatprep.subr.bf16.mxu0 0
    %729 = vmatpush1.bf16.msra.mxu0 %v522
    %730 = vmatprep.subr.bf16.mxu0 0
    %731 = vmatpush1.bf16.msra.mxu0 %v523
    %732 = vmatprep.subr.bf16.mxu0 0
    %733 = vmatpush1.bf16.msra.mxu0 %v524
    %734 = vmatprep.subr.bf16.mxu0 0
    %735 = vmatpush1.bf16.msra.mxu0 %v525
    %736 = vmatprep.subr.bf16.mxu0 0
    %737 = vmatpush1.bf16.msra.mxu0 %v526
    %738 = vmatprep.subr.bf16.mxu0 0
    %739 = vmatpush1.bf16.msra.mxu0 %v527
    %740 = vmatprep.subr.bf16.mxu0 0
    %741 = vmatpush1.bf16.msra.mxu0 %v528
    %742 = vmatprep.subr.bf16.mxu0 0
    %743 = vmatpush1.bf16.msra.mxu0 %v529
    %744 = vmatprep.subr.bf16.mxu0 0
    %745 = vmatpush1.bf16.msra.mxu0 %v530
    %746 = vmatprep.subr.bf16.mxu0 0
    %747 = vmatpush1.bf16.msra.mxu0 %v531
    %748 = vmatprep.mubr.bf16.mxu0 %v79
    %749 = vmatmul.mubr.bf16.gmra.mrb[0].mxu0 %v78
    %v750 = vpop.f32.mrb[0].mxu0
    %v751 = vadd.f32 %v711, %v750
    %v752 = vpop.f32.mrb[0].mxu0
    %v753 = vpop.f32.mrb[0].mxu0
    %v754 = vpop.f32.mrb[0].mxu0
    %755 = vdwg.mxu0
    %v756 = vmax.f32 %v751, 0.0
    %v757 = vmul.f32 %v756, %v756
    %vm758 = vcmask 254976
    %v759 = vsel %vm758, %v757, 0.0
    %760 = vadd.xlane.f32.xlu0 %v759
    %v761 = vpop.xlane.xlu0 %760
    %v762 = vmax.f32 %v761, 1e-24
    %v763 = vrsqrt.pop %v762
    %v764 = vmul.f32 %v756, %v763
    %766 = vrot.lane.b32.xlu0 %v764, 32
    %v767 = vpop.permute.xlu0 %766
    %769 = vrot.lane.b32.xlu0 %v764, 64
    %v770 = vpop.permute.xlu0 %769
    %772 = vrot.lane.b32.xlu0 %v764, 96
    %v773 = vpop.permute.xlu0 %772
    %vm775 = vcmask 261120
    %v776 = vsel %vm775, %v764, %v767
    %vm777 = vcmask 523264
    %v778 = vsel %vm777, %v776, %v770
    %vm779 = vcmask 785408
    %v780 = vsel %vm779, %v778, %v773
    %v781 = vlaneseq
    %v782 = vshrl.u32 %v781, 7
    %v783 = vsub.s32 0, %v782
    %v784 = vrot.slane %v25, %v783
    %v785 = vsub.f32 %v780, %v784
    %v786 = vmul.f32 %v785, %v785
    %v787 = vsub.f32 0.0, %v786
    %v788 = vlaneseq
    %v789 = vshrl.u32 %v788, 7
    %v790 = vsub.s32 1, %v789
    %v791 = vrot.slane %v25, %v790
    %v792 = vmul.f32 %v787, %v791
    %v793 = vmul.f32 %v792, 1.442695
    %v794 = vpow.pop %v793
    %v795 = vld [vmem:[%s3] sm:$0xff]
    %v796 = vld [vmem:[%s3 + $0x8] sm:$0xff]
    %v797 = vld [vmem:[%s3 + $0x10] sm:$0xff]
    %v798 = vld [vmem:[%s3 + $0x18] sm:$0xff]
    %v799 = vld [vmem:[%s3 + $0x20] sm:$0xff]
    %v800 = vld [vmem:[%s3 + $0x28] sm:$0xff]
    %v801 = vld [vmem:[%s3 + $0x30] sm:$0xff]
    %v802 = vld [vmem:[%s3 + $0x38] sm:$0xff]
    %v803 = vld [vmem:[%s3 + $0x40] sm:$0xff]
    %v804 = vld [vmem:[%s3 + $0x48] sm:$0xff]
    %v805 = vld [vmem:[%s3 + $0x50] sm:$0xff]
    %v806 = vld [vmem:[%s3 + $0x58] sm:$0xff]
    %v807 = vld [vmem:[%s3 + $0x60] sm:$0xff]
    %v808 = vld [vmem:[%s3 + $0x68] sm:$0xff]
    %v809 = vld [vmem:[%s3 + $0x70] sm:$0xff]
    %v810 = vld [vmem:[%s3 + $0x78] sm:$0xff]
    %v811 = vlaneseq
    %v812 = vshrl.u32 %v811, 7
    %v813 = vsub.s32 4, %v812
    %v814 = vrot.slane %v25, %v813
    %815 = vmatprep.subr.mxu0 0.0
    %816 = vmatpush1.msra.mxu0 %v795
    %817 = vmatprep.subr.mxu0 0.0
    %818 = vmatpush1.msra.mxu0 %v796
    %819 = vmatprep.subr.mxu0 0.0
    %820 = vmatpush1.msra.mxu0 %v797
    %821 = vmatprep.subr.mxu0 0.0
    %822 = vmatpush1.msra.mxu0 %v798
    %823 = vmatprep.subr.mxu0 0.0
    %824 = vmatpush1.msra.mxu0 %v799
    %825 = vmatprep.subr.mxu0 0.0
    %826 = vmatpush1.msra.mxu0 %v800
    %827 = vmatprep.subr.mxu0 0.0
    %828 = vmatpush1.msra.mxu0 %v801
    %829 = vmatprep.subr.mxu0 0.0
    %830 = vmatpush1.msra.mxu0 %v802
    %831 = vmatprep.subr.mxu0 0.0
    %832 = vmatpush1.msra.mxu0 %v803
    %833 = vmatprep.subr.mxu0 0.0
    %834 = vmatpush1.msra.mxu0 %v804
    %835 = vmatprep.subr.mxu0 0.0
    %836 = vmatpush1.msra.mxu0 %v805
    %837 = vmatprep.subr.mxu0 0.0
    %838 = vmatpush1.msra.mxu0 %v806
    %839 = vmatprep.subr.mxu0 0.0
    %840 = vmatpush1.msra.mxu0 %v807
    %841 = vmatprep.subr.mxu0 0.0
    %842 = vmatpush1.msra.mxu0 %v808
    %843 = vmatprep.subr.mxu0 0.0
    %844 = vmatpush1.msra.mxu0 %v809
    %845 = vmatprep.subr.mxu0 0.0
    %846 = vmatpush1.msra.mxu0 %v810
    %847 = vmatprep.subr.mxu0 0.0
    %848 = vmatpush1.msra.mxu0 0.0
    %849 = vmatprep.subr.mxu0 0.0
    %850 = vmatpush1.msra.mxu0 0.0
    %851 = vmatprep.subr.mxu0 0.0
    %852 = vmatpush1.msra.mxu0 0.0
    %853 = vmatprep.subr.mxu0 0.0
    %854 = vmatpush1.msra.mxu0 0.0
    %855 = vmatprep.subr.mxu0 0.0
    %856 = vmatpush1.msra.mxu0 0.0
    %857 = vmatprep.subr.mxu0 0.0
    %858 = vmatpush1.msra.mxu0 0.0
    %859 = vmatprep.subr.mxu0 0.0
    %860 = vmatpush1.msra.mxu0 0.0
    %861 = vmatprep.subr.mxu0 0.0
    %862 = vmatpush1.msra.mxu0 0.0
    %863 = vmatprep.subr.mxu0 0.0
    %864 = vmatpush1.msra.mxu0 0.0
    %865 = vmatprep.subr.mxu0 0.0
    %866 = vmatpush1.msra.mxu0 0.0
    %867 = vmatprep.subr.mxu0 0.0
    %868 = vmatpush1.msra.mxu0 0.0
    %869 = vmatprep.subr.mxu0 0.0
    %870 = vmatpush1.msra.mxu0 0.0
    %871 = vmatprep.subr.mxu0 0.0
    %872 = vmatpush1.msra.mxu0 0.0
    %873 = vmatprep.subr.mxu0 0.0
    %874 = vmatpush1.msra.mxu0 0.0
    %875 = vmatprep.subr.mxu0 0.0
    %876 = vmatpush1.msra.mxu0 0.0
    %877 = vmatprep.subr.mxu0 0.0
    %878 = vmatpush1.msra.mxu0 0.0
    %879 = vmatprep.mubr.f32.mxu0 0.0
    %880 = vmatmul.mubr.f32.gmra.mrb[0].mxu0 %v794
    %v881 = vpop.f32.mrb[0].mxu0
    %v882 = vadd.f32 %v814, %v881
    %v883 = vpop.f32.mrb[0].mxu0
    %884 = vdwg.mxu0
    %v885 = vmax.f32 %v882, 0.0
    %v886 = vld [vmem:[%s4] sm:$0xff]
    %v887 = vld [vmem:[%s4 + $0x8] sm:$0xff]
    %v888 = vld [vmem:[%s4 + $0x10] sm:$0xff]
    %v889 = vld [vmem:[%s4 + $0x18] sm:$0xff]
    %v890 = vlaneseq
    %v891 = vshrl.u32 %v890, 7
    %v892 = vsub.s32 5, %v891
    %v893 = vrot.slane %v25, %v892
    %v895 = vsel %vm775, %v885, 0
    %897 = vmatprep.subr.mxu0 0.0
    %898 = vmatpush1.msra.mxu0 %v886
    %899 = vmatprep.subr.mxu0 0.0
    %900 = vmatpush1.msra.mxu0 %v887
    %901 = vmatprep.subr.mxu0 0.0
    %902 = vmatpush1.msra.mxu0 %v888
    %903 = vmatprep.subr.mxu0 0.0
    %904 = vmatpush1.msra.mxu0 %v889
    %905 = vmatprep.subr.mxu0 0.0
    %906 = vmatpush1.msra.mxu0 0.0
    %907 = vmatprep.subr.mxu0 0.0
    %908 = vmatpush1.msra.mxu0 0.0
    %909 = vmatprep.subr.mxu0 0.0
    %910 = vmatpush1.msra.mxu0 0.0
    %911 = vmatprep.subr.mxu0 0.0
    %912 = vmatpush1.msra.mxu0 0.0
    %913 = vmatprep.subr.mxu0 0.0
    %914 = vmatpush1.msra.mxu0 0.0
    %915 = vmatprep.subr.mxu0 0.0
    %916 = vmatpush1.msra.mxu0 0.0
    %917 = vmatprep.subr.mxu0 0.0
    %918 = vmatpush1.msra.mxu0 0.0
    %919 = vmatprep.subr.mxu0 0.0
    %920 = vmatpush1.msra.mxu0 0.0
    %921 = vmatprep.subr.mxu0 0.0
    %922 = vmatpush1.msra.mxu0 0.0
    %923 = vmatprep.subr.mxu0 0.0
    %924 = vmatpush1.msra.mxu0 0.0
    %925 = vmatprep.subr.mxu0 0.0
    %926 = vmatpush1.msra.mxu0 0.0
    %927 = vmatprep.subr.mxu0 0.0
    %928 = vmatpush1.msra.mxu0 0.0
    %929 = vmatprep.subr.mxu0 0.0
    %930 = vmatpush1.msra.mxu0 0.0
    %931 = vmatprep.subr.mxu0 0.0
    %932 = vmatpush1.msra.mxu0 0.0
    %933 = vmatprep.subr.mxu0 0.0
    %934 = vmatpush1.msra.mxu0 0.0
    %935 = vmatprep.subr.mxu0 0.0
    %936 = vmatpush1.msra.mxu0 0.0
    %937 = vmatprep.subr.mxu0 0.0
    %938 = vmatpush1.msra.mxu0 0.0
    %939 = vmatprep.subr.mxu0 0.0
    %940 = vmatpush1.msra.mxu0 0.0
    %941 = vmatprep.subr.mxu0 0.0
    %942 = vmatpush1.msra.mxu0 0.0
    %943 = vmatprep.subr.mxu0 0.0
    %944 = vmatpush1.msra.mxu0 0.0
    %945 = vmatprep.subr.mxu0 0.0
    %946 = vmatpush1.msra.mxu0 0.0
    %947 = vmatprep.subr.mxu0 0.0
    %948 = vmatpush1.msra.mxu0 0.0
    %949 = vmatprep.subr.mxu0 0.0
    %950 = vmatpush1.msra.mxu0 0.0
    %951 = vmatprep.subr.mxu0 0.0
    %952 = vmatpush1.msra.mxu0 0.0
    %953 = vmatprep.subr.mxu0 0.0
    %954 = vmatpush1.msra.mxu0 0.0
    %955 = vmatprep.subr.mxu0 0.0
    %956 = vmatpush1.msra.mxu0 0.0
    %957 = vmatprep.subr.mxu0 0.0
    %958 = vmatpush1.msra.mxu0 0.0
    %959 = vmatprep.subr.mxu0 0.0
    %960 = vmatpush1.msra.mxu0 0.0
    %961 = vmatprep.mubr.f32.mxu0 0.0
    %962 = vmatmul.mubr.f32.gmra.mrb[0].mxu0 %v895
    %v963 = vpop.f32.mrb[0].mxu0
    %v964 = vadd.f32 %v893, %v963
    %v965 = vpop.f32.mrb[0].mxu0
    %966 = vdwg.mxu0
    %v967 = vmax.f32 %v964, 0.0
    %v968 = vld [vmem:[%s5] sm:$0xff]
    %v969 = vld [vmem:[%s5 + $0x8] sm:$0xff]
    %v970 = vld [vmem:[%s5 + $0x10] sm:$0xff]
    %v971 = vld [vmem:[%s5 + $0x18] sm:$0xff]
    %v972 = vlaneseq
    %v973 = vshrl.u32 %v972, 7
    %v974 = vsub.s32 2, %v973
    %v975 = vrot.slane %v25, %v974
    %v977 = vsel %vm775, %v967, 0
    %979 = vmatprep.subr.mxu0 0.0
    %980 = vmatpush1.msra.mxu0 %v968
    %981 = vmatprep.subr.mxu0 0.0
    %982 = vmatpush1.msra.mxu0 %v969
    %983 = vmatprep.subr.mxu0 0.0
    %984 = vmatpush1.msra.mxu0 %v970
    %985 = vmatprep.subr.mxu0 0.0
    %986 = vmatpush1.msra.mxu0 %v971
    %987 = vmatprep.subr.mxu0 0.0
    %988 = vmatpush1.msra.mxu0 0.0
    %989 = vmatprep.subr.mxu0 0.0
    %990 = vmatpush1.msra.mxu0 0.0
    %991 = vmatprep.subr.mxu0 0.0
    %992 = vmatpush1.msra.mxu0 0.0
    %993 = vmatprep.subr.mxu0 0.0
    %994 = vmatpush1.msra.mxu0 0.0
    %995 = vmatprep.subr.mxu0 0.0
    %996 = vmatpush1.msra.mxu0 0.0
    %997 = vmatprep.subr.mxu0 0.0
    %998 = vmatpush1.msra.mxu0 0.0
    %999 = vmatprep.subr.mxu0 0.0
    %1000 = vmatpush1.msra.mxu0 0.0
    %1001 = vmatprep.subr.mxu0 0.0
    %1002 = vmatpush1.msra.mxu0 0.0
    %1003 = vmatprep.subr.mxu0 0.0
    %1004 = vmatpush1.msra.mxu0 0.0
    %1005 = vmatprep.subr.mxu0 0.0
    %1006 = vmatpush1.msra.mxu0 0.0
    %1007 = vmatprep.subr.mxu0 0.0
    %1008 = vmatpush1.msra.mxu0 0.0
    %1009 = vmatprep.subr.mxu0 0.0
    %1010 = vmatpush1.msra.mxu0 0.0
    %1011 = vmatprep.subr.mxu0 0.0
    %1012 = vmatpush1.msra.mxu0 0.0
    %1013 = vmatprep.subr.mxu0 0.0
    %1014 = vmatpush1.msra.mxu0 0.0
    %1015 = vmatprep.subr.mxu0 0.0
    %1016 = vmatpush1.msra.mxu0 0.0
    %1017 = vmatprep.subr.mxu0 0.0
    %1018 = vmatpush1.msra.mxu0 0.0
    %1019 = vmatprep.subr.mxu0 0.0
    %1020 = vmatpush1.msra.mxu0 0.0
    %1021 = vmatprep.subr.mxu0 0.0
    %1022 = vmatpush1.msra.mxu0 0.0
    %1023 = vmatprep.subr.mxu0 0.0
    %1024 = vmatpush1.msra.mxu0 0.0
    %1025 = vmatprep.subr.mxu0 0.0
    %1026 = vmatpush1.msra.mxu0 0.0
    %1027 = vmatprep.subr.mxu0 0.0
    %1028 = vmatpush1.msra.mxu0 0.0
    %1029 = vmatprep.subr.mxu0 0.0
    %1030 = vmatpush1.msra.mxu0 0.0
    %1031 = vmatprep.subr.mxu0 0.0
    %1032 = vmatpush1.msra.mxu0 0.0
    %1033 = vmatprep.subr.mxu0 0.0
    %1034 = vmatpush1.msra.mxu0 0.0
    %1035 = vmatprep.subr.mxu0 0.0
    %1036 = vmatpush1.msra.mxu0 0.0
    %1037 = vmatprep.subr.mxu0 0.0
    %1038 = vmatpush1.msra.mxu0 0.0
    %1039 = vmatprep.subr.mxu0 0.0
    %1040 = vmatpush1.msra.mxu0 0.0
    %1041 = vmatprep.subr.mxu0 0.0
    %1042 = vmatpush1.msra.mxu0 0.0
    %1043 = vmatprep.mubr.f32.mxu0 0.0
    %1044 = vmatmul.mubr.f32.gmra.mrb[0].mxu0 %v977
    %v1045 = vpop.f32.mrb[0].mxu0
    %v1046 = vadd.f32 %v975, %v1045
    %v1047 = vpop.f32.mrb[0].mxu0
    %1048 = vdwg.mxu0
    %1049 = vst [vmem:[#allocation2] sm:$0x3] %v1046
    // Predicated region
    $region26: #{predictor_forward.1} parent=1 // pred_check
      _
    $region27: #{predictor_forward.1} parent=1 // pred_check_branch
      %1051 = sbr.rel (0) target = $region29
    $region28: #{predictor_forward.1} parent=1 // pred_region
      %s1053 = ssub.s32 32, 32
      %1054 = vsyncadd [#allocation3], %s1053
      %s1056 = sshll.u32 [#allocation2], 4
      %s1057 = int_to_ptr.vmem [resolvable:$true] %s1056
      %1059 = dma.vmem_to_hbm [thread:$0]  %s1057, 32, %s6, [#allocation3]
    $region29: #{predictor_forward.1} parent=1 // pred_fallthru
      _
    // Predicated region
    $region30: #{predictor_forward.1} parent=1 // pred_check
      _
    $region31: #{predictor_forward.1} parent=1 // pred_check_branch
      %1061 = sbr.rel (0) target = $region33
    $region32: #{predictor_forward.1} parent=1 // pred_region
      %1062 = dma.done [#allocation3], 32
    $region33: #{predictor_forward.1} parent=1 // pred_fallthru
      _
    %1063 = vsyncpa [#allocation3], 1

</llo_original>
